<compile_context>
chip_gen: v6e
topology: v6e:2x2x1
jax: 0.10.0
libtpu: 0.0.40
codegen_flags: <defaults>
</compile_context>

<pallas_src>
import jax
import jax.numpy as jnp
import numpy as np
from jax import lax
from jax.experimental import pallas as pl
from jax.experimental.pallas import tpu as pltpu


def rho(x):
    # netClasses.py: rho(x) = x.clamp(min=0).clamp(max=1)
    return jnp.clip(x, 0.0, 1.0)


def _pick_batch_tile(b_pad, max_tile):
    for tb in (512, 384, 256, 128, 64, 32, 16, 8):
        if tb <= max_tile and b_pad % tb == 0:
            return tb
    return 8


def make_vfdisc_forward(weights, biases, T, *, dt=1.0,
                        weight_dtype=jnp.bfloat16, max_batch_tile=256,
                        interpret=False):
    """Build a jitted free-phase forward (method='nograd', beta=0) for VFdisc.

    weights: PyTorch-layout (out, in) matrices [w0, w1, ..., w_{2(ns-1)}]
    biases:  [b0, None, b2, None, ..., b_last]  (None where bias=False)

    Weight/bias packing happens ONCE here (host-side numpy, zero per-call
    dispatches). The returned callable forward(data, [s0, ..., s_{ns-1}]) is
    jitted; it only packs/unpacks the cheap per-call state around the kernel.
    """
    nsyn = len(weights)
    ns = (nsyn + 1) // 2
    sizes = [int(weights[2 * i].shape[0]) for i in range(ns - 1)]
    sizes.append(int(weights[-1].shape[0]))
    D = int(weights[-1].shape[1])
    total = int(sum(sizes))
    P = max(128, ((total + 127) // 128) * 128)          # packed lane width
    offs = [0]
    for n in sizes:
        offs.append(offs[-1] + n)

    # ---- one-time packing (hoisted out of the per-call path) -----------------
    Wp_np = np.zeros((P, P), np.float32)                # rows = old state, cols = new state
    bp_np = np.zeros((1, P), np.float32)
    for i in range(ns - 1):
        w_fwd = np.asarray(weights[2 * i], np.float32)      # (n_i, n_{i+1})
        w_bwd = np.asarray(weights[2 * i + 1], np.float32)  # (n_{i+1}, n_i)
        Wp_np[offs[i + 1]:offs[i + 2], offs[i]:offs[i + 1]] = w_fwd.T   # s[i+1] -> s[i]
        Wp_np[offs[i]:offs[i + 1], offs[i + 1]:offs[i + 2]] = w_bwd.T   # s[i]   -> s[i+1]
        if biases[2 * i] is not None:
            bp_np[0, offs[i]:offs[i + 1]] = np.asarray(biases[2 * i], np.float32)
    W4p_np = np.zeros((D, P), np.float32)
    W4p_np[:, offs[ns - 1]:offs[ns]] = np.asarray(weights[-1], np.float32).T
    if biases[-1] is not None:
        bp_np[0, offs[ns - 1]:offs[ns]] = np.asarray(biases[-1], np.float32)

    # Single-MXU-pass weights: bf16 operands, f32 accumulation. Biases stay f32.
    Wp = jnp.asarray(Wp_np, weight_dtype)
    W4p = jnp.asarray(W4p_np, weight_dtype)
    bp = jnp.asarray(bp_np, jnp.float32)

    dt = float(dt)
    dt_is_one = (dt == 1.0)
    T = int(T)
    unroll = True if T <= 16 else 8

    # ---- kernel ---------------------------------------------------------------
    def kernel(data_ref, sp_ref, wp_ref, w4p_ref, bp_ref, o_ref):
        # Loop-invariant drive: data @ W_last^T (packed) + packed biases.
        drive = jnp.dot(data_ref[...].astype(weight_dtype), w4p_ref[...],
                        preferred_element_type=jnp.float32) + bp_ref[...]
        wp = wp_ref[...]          # at P=128 bf16 this is 8 vregs; safe to hoist
        # TODO(synk): for large P keep the loop-invariant RHS stationary in the
        # MXU (pltpu.matmul_push_rhs / matmul_acc_lhs / matmul_pop) instead of
        # re-pushing it from vregs every unrolled step.

        def step(_, sp):
            # Jacobi update from the old packed state (matches VFdisc.stepper).
            pre = jnp.dot(sp.astype(weight_dtype), wp,
                          preferred_element_type=jnp.float32) + drive
            new = rho(pre)
            if dt_is_one:                         # dt = 1: Euler update collapses
                return new
            return (1.0 - dt) * sp + dt * new

        # T == 0 falls through to writing the initial packed state once.
        o_ref[...] = lax.fori_loop(0, T, step, sp_ref[...], unroll=unroll)

    # ---- jitted per-call wrapper (pack state -> kernel -> unpack) --------------
    def forward(data, s):
        f32 = jnp.float32
        B = data.shape[0]
        B_pad = ((B + 7) // 8) * 8                  # sublane multiple
        TB = _pick_batch_tile(B_pad, max_batch_tile)

        sp0 = jnp.zeros((B_pad, P), f32)
        for i in range(ns):
            sp0 = sp0.at[:B, offs[i]:offs[i + 1]].set(s[i].astype(f32))
        data_p = data.astype(f32)
        if B_pad != B:
            data_p = jnp.zeros((B_pad, D), f32).at[:B, :].set(data_p)

        wsize = jnp.dtype(weight_dtype).itemsize
        est = 2 * ((P * P + D * P) * wsize + P * 4)      # weights + bias (x2 buffers)
        est += 2 * 2 * TB * P * 4 + 2 * TB * D * 4        # state in/out + data blocks
        vmem_limit = None if est < (8 << 20) else min(int(est * 5 // 4) + (2 << 20),
                                                      100 << 20)
        # TODO(synk): on v7x with large P, add pipeline_mode=pl.Buffered(1) to the
        # loop-invariant weight specs (no pipelining benefit, halves weight VMEM).

        sp_out = pl.pallas_call(
            kernel,
            out_shape=jax.ShapeDtypeStruct((B_pad, P), f32),
            grid_spec=pltpu.PrefetchScalarGridSpec(
                num_scalar_prefetch=0,
                grid=(B_pad // TB,),
                in_specs=[
                    pl.BlockSpec((TB, D), lambda i: (i, 0)),    # data (batch-tiled)
                    pl.BlockSpec((TB, P), lambda i: (i, 0)),    # packed initial state
                    pl.BlockSpec((P, P), lambda i: (0, 0)),     # recurrent block weights
                    pl.BlockSpec((D, P), lambda i: (0, 0)),     # data-drive weights
                    pl.BlockSpec((1, P), lambda i: (0, 0)),     # packed biases
                ],
                out_specs=pl.BlockSpec((TB, P), lambda i: (i, 0))),
            compiler_params=pltpu.CompilerParams(
                dimension_semantics=("parallel",),              # megacore on v7x
                vmem_limit_bytes=vmem_limit),
            interpret=interpret,
        )(data_p, sp0, Wp, W4p, bp)

        return [sp_out[:B, offs[i]:offs[i + 1]] for i in range(ns)]

    jitted = jax.jit(forward)

    def api(data, s):
        return jitted(data, s)

    api.packed = (Wp, W4p, bp, tuple(offs), P)      # exposed for testing
    return api


def reference_forward(data, s, weights, biases, T, dt=1.0):
    """Pure-JAX f32 reference matching the PyTorch VFdisc.stepper loop (Jacobi)."""
    s = [si.astype(jnp.float32) for si in s]
    ns = len(s)
    for _ in range(int(T)):
        dsdt = [-s[0] + rho(s[1] @ weights[0].T + biases[0])]
        for i in range(1, ns - 1):
            pre = (s[i + 1] @ weights[2 * i].T + biases[2 * i]
                   + s[i - 1] @ weights[2 * i - 1].T)
            dsdt.append(-s[i] + rho(pre))
        dsdt.append(-s[-1] + rho(data @ weights[-1].T + biases[-1]
                                 + s[-2] @ weights[-2].T))
        s = [s[i] + dt * dsdt[i] for i in range(ns)]
    return s


def reference_forward_packed(data, s, packed, T, dt=1.0):
    """Pure-JAX mirror of the kernel's exact numerics (packed bf16 weights)."""
    Wp, W4p, bp, offs, P = packed
    wdtype = Wp.dtype
    ns = len(s)
    B = data.shape[0]
    sp = jnp.zeros((B, P), jnp.float32)
    for i in range(ns):
        sp = sp.at[:, offs[i]:offs[i + 1]].set(s[i].astype(jnp.float32))
    drive = jnp.dot(data.astype(wdtype), W4p, preferred_element_type=jnp.float32) + bp
    for _ in range(int(T)):
        pre = jnp.dot(sp.astype(wdtype), Wp, preferred_element_type=jnp.float32) + drive
        new = rho(pre)
        sp = new if dt == 1.0 else (1.0 - dt) * sp + dt * new
    return [sp[:, offs[i]:offs[i + 1]] for i in range(ns)]


if __name__ == "__main__":
    # size_tab = [output, hidden, hidden, data]  ->  ns = 3, nsyn = 5 layers.
    size_tab = [16, 32, 64, 128]
    B = 8
    T = 4

    key = jax.random.PRNGKey(0)
    keys = jax.random.split(key, 7)

    def lin_w(k, out_f, in_f):
        bound = 1.0 / np.sqrt(in_f)
        return jax.random.uniform(k, (out_f, in_f), jnp.float32, -bound, bound)

    def lin_b(k, out_f, in_f):
        bound = 1.0 / np.sqrt(in_f)
        return jax.random.uniform(k, (out_f,), jnp.float32, -bound, bound)

    # w[0]: Linear(size_tab[1] -> size_tab[0], bias) ; w[1] = w[0].T (no bias)
    # w[2]: Linear(size_tab[2] -> size_tab[1], bias) ; w[3] = w[2].T (no bias)
    # w[4]: Linear(size_tab[3] -> size_tab[2], bias)
    w0 = lin_w(keys[0], size_tab[0], size_tab[1])
    b0 = lin_b(keys[1], size_tab[0], size_tab[1])
    w1 = jnp.transpose(w0)      # backward weights initialized symmetric (angle == 0)
    w2 = lin_w(keys[2], size_tab[1], size_tab[2])
    b2 = lin_b(keys[3], size_tab[1], size_tab[2])
    w3 = jnp.transpose(w2)
    w4 = lin_w(keys[4], size_tab[2], size_tab[3])
    b4 = lin_b(keys[5], size_tab[2], size_tab[3])

    weights = [w0, w1, w2, w3, w4]
    biases = [b0, None, b2, None, b4]

    data = jax.random.normal(keys[6], (B, size_tab[-1]), jnp.float32)
    # initHidden: zero states.
    s_init = [jnp.zeros((B, n), jnp.float32) for n in size_tab[:-1]]

    # Packing happens once here; the returned forward is jitted.
    forward = make_vfdisc_forward(weights, biases, T)
    out = forward(data, s_init)
    out = jax.block_until_ready(out)

    # Tight check: exact mirror of the kernel numerics (same packed bf16 weights).
    ref_packed = reference_forward_packed(data, s_init, forward.packed, T)
    for o, r in zip(out, ref_packed):
        np.testing.assert_allclose(np.asarray(o), np.asarray(r), rtol=1e-5, atol=1e-5)

    # Sanity check vs. the original f32 PyTorch semantics (bounded bf16 drift).
    ref_f32 = reference_forward(data, s_init, weights, biases, T)
    for o, r in zip(out, ref_f32):
        np.testing.assert_allclose(np.asarray(o), np.asarray(r), rtol=0, atol=5e-2)

    print("KERNEL_OK")
</pallas_src>

<mosaic_0001>
module attributes {stable_mosaic.version = 11 : i64} {
  func.func @kernel(%arg0: i32, %arg1: memref<8x128xf32, #tpu.memory_space<vmem>>, %arg2: memref<8x128xf32, #tpu.memory_space<vmem>>, %arg3: memref<128x128xbf16, #tpu.memory_space<vmem>>, %arg4: memref<128x128xbf16, #tpu.memory_space<vmem>>, %arg5: memref<1x128xf32, #tpu.memory_space<vmem>>, %arg6: memref<8x128xf32, #tpu.memory_space<vmem>>) attributes {dimension_semantics = [#tpu.dimension_semantics<parallel>], iteration_bounds = array<i64: 1>, scalar_prefetch = 0 : i64, scratch_operands = 0 : i64, tpu.core_type = #tpu.core_type<tc>, window_params = [{transform_indices = @transform_0, window_bounds = array<i64: 8, 128>}, {transform_indices = @transform_1, window_bounds = array<i64: 8, 128>}, {pipeline_mode = #tpu.pipeline_mode<synchronous>, transform_indices = @transform_2, window_bounds = array<i64: 128, 128>}, {pipeline_mode = #tpu.pipeline_mode<synchronous>, transform_indices = @transform_3, window_bounds = array<i64: 128, 128>}, {pipeline_mode = #tpu.pipeline_mode<synchronous>, transform_indices = @transform_4, window_bounds = array<i64: 1, 128>}, {transform_indices = @transform_5, window_bounds = array<i64: 8, 128>}]} {
    %c0 = arith.constant 0 : index
    %c0_0 = arith.constant 0 : index
    %0 = vector.load %arg1[%c0, %c0_0] : memref<8x128xf32, #tpu.memory_space<vmem>>, vector<8x128xf32>
    %1 = arith.truncf %0 : vector<8x128xf32> to vector<8x128xbf16>
    %c0_1 = arith.constant 0 : index
    %c0_2 = arith.constant 0 : index
    %2 = vector.load %arg4[%c0_1, %c0_2] : memref<128x128xbf16, #tpu.memory_space<vmem>>, vector<128x128xbf16>
    %cst = arith.constant dense<0.000000e+00> : vector<8x128xf32>
    %3 = tpu.matmul %1, %2, %cst {dimension_numbers = #tpu.dot_dimension_numbers<[1], [0], [0], [1], [0, 0, 1, 1], [], []>} : vector<8x128xbf16>, vector<128x128xbf16>, vector<8x128xf32> -> vector<8x128xf32>
    %c0_3 = arith.constant 0 : index
    %c0_4 = arith.constant 0 : index
    %4 = vector.load %arg5[%c0_3, %c0_4] : memref<1x128xf32, #tpu.memory_space<vmem>>, vector<1x128xf32>
    %5 = vector.broadcast %4 : vector<1x128xf32> to vector<8x128xf32>
    %6 = arith.addf %3, %5 : vector<8x128xf32>
    %c0_5 = arith.constant 0 : index
    %c0_6 = arith.constant 0 : index
    %7 = vector.load %arg3[%c0_5, %c0_6] : memref<128x128xbf16, #tpu.memory_space<vmem>>, vector<128x128xbf16>
    %c0_7 = arith.constant 0 : index
    %c0_8 = arith.constant 0 : index
    %8 = vector.load %arg2[%c0_7, %c0_8] : memref<8x128xf32, #tpu.memory_space<vmem>>, vector<8x128xf32>
    %c0_i32 = arith.constant 0 : i32
    %9 = arith.truncf %8 : vector<8x128xf32> to vector<8x128xbf16>
    %cst_9 = arith.constant dense<0.000000e+00> : vector<8x128xf32>
    %10 = tpu.matmul %9, %7, %cst_9 {dimension_numbers = #tpu.dot_dimension_numbers<[1], [0], [0], [1], [0, 0, 1, 1], [], []>} : vector<8x128xbf16>, vector<128x128xbf16>, vector<8x128xf32> -> vector<8x128xf32>
    %11 = arith.addf %10, %6 : vector<8x128xf32>
    %cst_10 = arith.constant 0.000000e+00 : f32
    %cst_11 = arith.constant 1.000000e+00 : f32
    %12 = vector.broadcast %cst_10 : f32 to vector<8x128xf32>
    %13 = arith.maximumf %12, %11 : vector<8x128xf32>
    %14 = vector.broadcast %cst_11 : f32 to vector<8x128xf32>
    %15 = arith.minimumf %14, %13 : vector<8x128xf32>
    %c1_i32 = arith.constant 1 : i32
    %16 = arith.truncf %15 : vector<8x128xf32> to vector<8x128xbf16>
    %cst_12 = arith.constant dense<0.000000e+00> : vector<8x128xf32>
    %17 = tpu.matmul %16, %7, %cst_12 {dimension_numbers = #tpu.dot_dimension_numbers<[1], [0], [0], [1], [0, 0, 1, 1], [], []>} : vector<8x128xbf16>, vector<128x128xbf16>, vector<8x128xf32> -> vector<8x128xf32>
    %18 = arith.addf %17, %6 : vector<8x128xf32>
    %cst_13 = arith.constant 0.000000e+00 : f32
    %cst_14 = arith.constant 1.000000e+00 : f32
    %19 = vector.broadcast %cst_13 : f32 to vector<8x128xf32>
    %20 = arith.maximumf %19, %18 : vector<8x128xf32>
    %21 = vector.broadcast %cst_14 : f32 to vector<8x128xf32>
    %22 = arith.minimumf %21, %20 : vector<8x128xf32>
    %c2_i32 = arith.constant 2 : i32
    %23 = arith.truncf %22 : vector<8x128xf32> to vector<8x128xbf16>
    %cst_15 = arith.constant dense<0.000000e+00> : vector<8x128xf32>
    %24 = tpu.matmul %23, %7, %cst_15 {dimension_numbers = #tpu.dot_dimension_numbers<[1], [0], [0], [1], [0, 0, 1, 1], [], []>} : vector<8x128xbf16>, vector<128x128xbf16>, vector<8x128xf32> -> vector<8x128xf32>
    %25 = arith.addf %24, %6 : vector<8x128xf32>
    %cst_16 = arith.constant 0.000000e+00 : f32
    %cst_17 = arith.constant 1.000000e+00 : f32
    %26 = vector.broadcast %cst_16 : f32 to vector<8x128xf32>
    %27 = arith.maximumf %26, %25 : vector<8x128xf32>
    %28 = vector.broadcast %cst_17 : f32 to vector<8x128xf32>
    %29 = arith.minimumf %28, %27 : vector<8x128xf32>
    %c3_i32 = arith.constant 3 : i32
    %30 = arith.truncf %29 : vector<8x128xf32> to vector<8x128xbf16>
    %cst_18 = arith.constant dense<0.000000e+00> : vector<8x128xf32>
    %31 = tpu.matmul %30, %7, %cst_18 {dimension_numbers = #tpu.dot_dimension_numbers<[1], [0], [0], [1], [0, 0, 1, 1], [], []>} : vector<8x128xbf16>, vector<128x128xbf16>, vector<8x128xf32> -> vector<8x128xf32>
    %32 = arith.addf %31, %6 : vector<8x128xf32>
    %cst_19 = arith.constant 0.000000e+00 : f32
    %cst_20 = arith.constant 1.000000e+00 : f32
    %33 = vector.broadcast %cst_19 : f32 to vector<8x128xf32>
    %34 = arith.maximumf %33, %32 : vector<8x128xf32>
    %35 = vector.broadcast %cst_20 : f32 to vector<8x128xf32>
    %36 = arith.minimumf %35, %34 : vector<8x128xf32>
    %c0_21 = arith.constant 0 : index
    %c0_22 = arith.constant 0 : index
    %37 = vector.load %arg6[%c0_21, %c0_22] : memref<8x128xf32, #tpu.memory_space<vmem>>, vector<8x128xf32>
    tpu.vector_store %arg6[%c0_21, %c0_22], %36 {strides = array<i32>} : memref<8x128xf32, #tpu.memory_space<vmem>>, vector<8x128xf32>,
    return
  }
  func.func @transform_0(%arg0: i32) -> (i32, i32) {
    %c0_i32 = arith.constant 0 : i32
    %c0_i32_0 = arith.constant 0 : i32
    return %arg0, %c0_i32 : i32, i32
  }
  func.func @transform_1(%arg0: i32) -> (i32, i32) {
    %c0_i32 = arith.constant 0 : i32
    %c0_i32_0 = arith.constant 0 : i32
    return %arg0, %c0_i32 : i32, i32
  }
  func.func @transform_2(%arg0: i32) -> (i32, i32) {
    %c0_i32 = arith.constant 0 : i32
    %c0_i32_0 = arith.constant 0 : i32
    %c0_i32_1 = arith.constant 0 : i32
    return %c0_i32, %c0_i32_0 : i32, i32
  }
  func.func @transform_3(%arg0: i32) -> (i32, i32) {
    %c0_i32 = arith.constant 0 : i32
    %c0_i32_0 = arith.constant 0 : i32
    %c0_i32_1 = arith.constant 0 : i32
    return %c0_i32, %c0_i32_0 : i32, i32
  }
  func.func @transform_4(%arg0: i32) -> (i32, i32) {
    %c0_i32 = arith.constant 0 : i32
    %c0_i32_0 = arith.constant 0 : i32
    %c0_i32_1 = arith.constant 0 : i32
    return %c0_i32, %c0_i32_0 : i32, i32
  }
  func.func @transform_5(%arg0: i32) -> (i32, i32) {
    %c0_i32 = arith.constant 0 : i32
    %c0_i32_0 = arith.constant 0 : i32
    return %arg0, %c0_i32 : i32, i32
  }
}

</mosaic_0001>

<llo_original>
// kernel: forward.1
$region0: #{forward.1}
  #allocation0 [shape = 'u32[]', space=smem, size = 0x4, offset = 0x4, fixed_abs, tag = 'smem constant byte address 0x4 - core index']
  #allocation1 [shape = 'u32[144,128]{1,0:T(1,128)}', space=vmem, size = 0x12000, scoped, tag = 'internal scratch']
  %s0 = inlined_call_operand.hbm [shape: f32[8,128], index: 0, kind: input, shape index: {}]
  %s1 = inlined_call_operand.vmem [shape: f32[8,128], index: 1, kind: input, shape index: {}]
  %s2 = inlined_call_operand.vmem [shape: bf16[128,128], index: 2, kind: input, shape index: {}]
  %s3 = inlined_call_operand.vmem [shape: bf16[128,128], index: 3, kind: input, shape index: {}]
  %s4 = inlined_call_operand.hbm [shape: f32[1,128], index: 4, kind: input, shape index: {}]
  %s5 = inlined_call_operand.vmem [shape: f32[8,128], index: 5, kind: output, shape index: {}]
  %s6 = sld [smem:[#allocation0]]
  $region38: #{forward.1} parent=0
    _
  %s8 = ssub.s32 1, %s6
  %s9 = scalar_select 0, %s8, %s6
  $region1: #{forward.1} parent=0
    #allocation2 [shape = 'u8[4096]{0}', space=vmem, size = 0x1000, scoped, tag = 'input window, operand 0, single buffered']
    #allocation3 [shape = 's32[1]{0}', space=sflag, size = 0x4, scoped, tag = 'scoped memory for forward.1']
    #allocation4 [shape = 'u8[512]{0}', space=vmem, size = 0x400, scoped, tag = 'input window, operand 4, single buffered']
    #allocation5 [shape = 's32[1]{0}', space=sflag, size = 0x4, scoped, tag = 'scoped memory for forward.1']
    %10 = vsyncpa [#allocation3], 0
    %11 = vsyncpa [#allocation5], 0
    // Predicated region
    $region2: #{forward.1} parent=1 // pred_check
      _
    $region3: #{forward.1} parent=1 // pred_check_branch
      %13 = sbr.rel (0) target = $region5
    $region4: #{forward.1} parent=1 // pred_region
      %s15 = ssub.s32 128, 128
      %16 = vsyncadd [#allocation3], %s15
      %s18 = sshll.u32 [#allocation2], 4
      %s19 = int_to_ptr.vmem [resolvable:$true] %s18
      %21 = dma.hbm_to_vmem [thread:$0]  %s0, 128, %s19, [#allocation3]
    $region5: #{forward.1} parent=1 // pred_fallthru
      _
    // Predicated region
    $region6: #{forward.1} parent=1 // pred_check
      _
    $region7: #{forward.1} parent=1 // pred_check_branch
      %23 = sbr.rel (0) target = $region9
    $region8: #{forward.1} parent=1 // pred_region
      _
    $region9: #{forward.1} parent=1 // pred_fallthru
      _
    // Predicated region
    $region10: #{forward.1} parent=1 // pred_check
      _
    $region11: #{forward.1} parent=1 // pred_check_branch
      %25 = sbr.rel (0) target = $region13
    $region12: #{forward.1} parent=1 // pred_region
      _
    $region13: #{forward.1} parent=1 // pred_fallthru
      _
    // Predicated region
    $region14: #{forward.1} parent=1 // pred_check
      _
    $region15: #{forward.1} parent=1 // pred_check_branch
      %27 = sbr.rel (0) target = $region17
    $region16: #{forward.1} parent=1 // pred_region
      _
    $region17: #{forward.1} parent=1 // pred_fallthru
      _
    // Predicated region
    $region18: #{forward.1} parent=1 // pred_check
      _
    $region19: #{forward.1} parent=1 // pred_check_branch
      %29 = sbr.rel (0) target = $region21
    $region20: #{forward.1} parent=1 // pred_region
      %s31 = ssub.s32 16, 16
      %32 = vsyncadd [#allocation5], %s31
      %s34 = sshll.u32 [#allocation4], 4
      %s35 = int_to_ptr.vmem [resolvable:$true] %s34
      %37 = dma.hbm_to_vmem [thread:$0]  %s4, 16, %s35, [#allocation5]
    $region21: #{forward.1} parent=1 // pred_fallthru
      _
    // Predicated region
    $region22: #{forward.1} parent=1 // pred_check
      _
    $region23: #{forward.1} parent=1 // pred_check_branch
      %39 = sbr.rel (0) target = $region25
    $region24: #{forward.1} parent=1 // pred_region
      %40 = dma.done [#allocation3], 128
    $region25: #{forward.1} parent=1 // pred_fallthru
      _
    // Predicated region
    $region26: #{forward.1} parent=1 // pred_check
      _
    $region27: #{forward.1} parent=1 // pred_check_branch
      %42 = sbr.rel (0) target = $region29
    $region28: #{forward.1} parent=1 // pred_region
      %43 = dma.done [#allocation5], 16
    $region29: #{forward.1} parent=1 // pred_fallthru
      _
    %v45 = vld [vmem:[#allocation2] sm:$0xff]
    %v46 = vpack.c.bf16 %v45, %v45
    %v47 = vld [vmem:[%s3] sm:$0xf]
    %v48 = vld [vmem:[%s3 + $0x4] sm:$0xf]
    %v49 = vld [vmem:[%s3 + $0x8] sm:$0xf]
    %v50 = vld [vmem:[%s3 + $0xc] sm:$0xf]
    %v51 = vld [vmem:[%s3 + $0x10] sm:$0xf]
    %v52 = vld [vmem:[%s3 + $0x14] sm:$0xf]
    %v53 = vld [vmem:[%s3 + $0x18] sm:$0xf]
    %v54 = vld [vmem:[%s3 + $0x1c] sm:$0xf]
    %v55 = vld [vmem:[%s3 + $0x20] sm:$0xf]
    %v56 = vld [vmem:[%s3 + $0x24] sm:$0xf]
    %v57 = vld [vmem:[%s3 + $0x28] sm:$0xf]
    %v58 = vld [vmem:[%s3 + $0x2c] sm:$0xf]
    %v59 = vld [vmem:[%s3 + $0x30] sm:$0xf]
    %v60 = vld [vmem:[%s3 + $0x34] sm:$0xf]
    %v61 = vld [vmem:[%s3 + $0x38] sm:$0xf]
    %v62 = vld [vmem:[%s3 + $0x3c] sm:$0xf]
    %v63 = vld [vmem:[#allocation4] sm:$0x1]
    %v65 = vlaneseq
    %v66 = vshrl.u32 %v65, 7
    %v67 = vsub.s32 0, %v66
    %v68 = vrot.slane %v63, %v67
    %v86 = vunpack.c.l.b16 %v47
    %v87 = vunpack.c.l.b16 %v48
    %v88 = vunpack.c.l.b16 %v49
    %v89 = vunpack.c.l.b16 %v50
    %v90 = vunpack.c.l.b16 %v51
    %v91 = vunpack.c.l.b16 %v52
    %v92 = vunpack.c.l.b16 %v53
    %v93 = vunpack.c.l.b16 %v54
    %v94 = vunpack.c.l.b16 %v55
    %v95 = vunpack.c.l.b16 %v56
    %v96 = vunpack.c.l.b16 %v57
    %v97 = vunpack.c.l.b16 %v58
    %v98 = vunpack.c.l.b16 %v59
    %v99 = vunpack.c.l.b16 %v60
    %v100 = vunpack.c.l.b16 %v61
    %v101 = vunpack.c.l.b16 %v62
    %v102 = vpack.c.b16 %v87, %v86
    %v103 = vpack.c.b16 %v89, %v88
    %v104 = vpack.c.b16 %v91, %v90
    %v105 = vpack.c.b16 %v93, %v92
    %v106 = vpack.c.b16 %v95, %v94
    %v107 = vpack.c.b16 %v97, %v96
    %v108 = vpack.c.b16 %v99, %v98
    %v109 = vpack.c.b16 %v101, %v100
    %118 = vmatprep.subr.bf16.mxu0 0
    %119 = vmatpush1.bf16.msra.mxu0 %v109
    %120 = vmatprep.subr.bf16.mxu0 0
    %121 = vmatpush1.bf16.msra.mxu0 %v108
    %122 = vmatprep.subr.bf16.mxu0 0
    %123 = vmatpush1.bf16.msra.mxu0 %v107
    %124 = vmatprep.subr.bf16.mxu0 0
    %125 = vmatpush1.bf16.msra.mxu0 %v106
    %126 = vmatprep.subr.bf16.mxu0 0
    %127 = vmatpush1.bf16.msra.mxu0 %v105
    %128 = vmatprep.subr.bf16.mxu0 0
    %129 = vmatpush1.bf16.msra.mxu0 %v104
    %130 = vmatprep.subr.bf16.mxu0 0
    %131 = vmatpush1.bf16.msra.mxu0 %v103
    %132 = vmatprep.subr.bf16.mxu0 0
    %133 = vmatpush1.bf16.msra.mxu0 %v102
    %134 = vmatprep.subr.bf16.mxu0 0
    %135 = vmatpush2.bf16.msra.mxu0 0
    %136 = vmatprep.subr.bf16.mxu0 0
    %137 = vmatpush2.bf16.msra.mxu0 0
    %138 = vmatprep.subr.bf16.mxu0 0
    %139 = vmatpush2.bf16.msra.mxu0 0
    %140 = vmatprep.subr.bf16.mxu0 0
    %141 = vmatpush2.bf16.msra.mxu0 0
    %142 = vmatprep.subr.bf16.mxu0 0
    %143 = vmatpush2.bf16.msra.mxu0 0
    %144 = vmatprep.subr.bf16.mxu0 0
    %145 = vmatpush2.bf16.msra.mxu0 0
    %146 = vmatprep.subr.bf16.mxu0 0
    %147 = vmatpush2.bf16.msra.mxu0 0
    %148 = vmatprep.subr.bf16.mxu0 0
    %149 = vmatpush2.bf16.msra.mxu0 0
    %150 = vmatprep.mubr.bf16.mxu0 0
    %151 = vmatmul.mubr.bf16.gmra.mxu0 %v46
    %v152 = vpop.f32.mrf.mxu0
    %v153 = vadd.f32 %v68, %v152
    %v154 = vpop.f32.mrf.mxu0
    %v155 = vpop.f32.mrf.mxu0
    %v156 = vpop.f32.mrf.mxu0
    %157 = vdwg.mxu0
    %v158 = vld [vmem:[%s2] sm:$0xf]
    %v159 = vld [vmem:[%s2 + $0x4] sm:$0xf]
    %v160 = vld [vmem:[%s2 + $0x8] sm:$0xf]
    %v161 = vld [vmem:[%s2 + $0xc] sm:$0xf]
    %v162 = vld [vmem:[%s2 + $0x10] sm:$0xf]
    %v163 = vld [vmem:[%s2 + $0x14] sm:$0xf]
    %v164 = vld [vmem:[%s2 + $0x18] sm:$0xf]
    %v165 = vld [vmem:[%s2 + $0x1c] sm:$0xf]
    %v166 = vld [vmem:[%s2 + $0x20] sm:$0xf]
    %v167 = vld [vmem:[%s2 + $0x24] sm:$0xf]
    %v168 = vld [vmem:[%s2 + $0x28] sm:$0xf]
    %v169 = vld [vmem:[%s2 + $0x2c] sm:$0xf]
    %v170 = vld [vmem:[%s2 + $0x30] sm:$0xf]
    %v171 = vld [vmem:[%s2 + $0x34] sm:$0xf]
    %v172 = vld [vmem:[%s2 + $0x38] sm:$0xf]
    %v173 = vld [vmem:[%s2 + $0x3c] sm:$0xf]
    %v174 = vld [vmem:[%s1] sm:$0xff]
    %v175 = vpack.c.bf16 %v174, %v174
    %v192 = vunpack.c.l.b16 %v158
    %v193 = vunpack.c.l.b16 %v159
    %v194 = vunpack.c.l.b16 %v160
    %v195 = vunpack.c.l.b16 %v161
    %v196 = vunpack.c.l.b16 %v162
    %v197 = vunpack.c.l.b16 %v163
    %v198 = vunpack.c.l.b16 %v164
    %v199 = vunpack.c.l.b16 %v165
    %v200 = vunpack.c.l.b16 %v166
    %v201 = vunpack.c.l.b16 %v167
    %v202 = vunpack.c.l.b16 %v168
    %v203 = vunpack.c.l.b16 %v169
    %v204 = vunpack.c.l.b16 %v170
    %v205 = vunpack.c.l.b16 %v171
    %v206 = vunpack.c.l.b16 %v172
    %v207 = vunpack.c.l.b16 %v173
    %v208 = vpack.c.b16 %v193, %v192
    %v209 = vpack.c.b16 %v195, %v194
    %v210 = vpack.c.b16 %v197, %v196
    %v211 = vpack.c.b16 %v199, %v198
    %v212 = vpack.c.b16 %v201, %v200
    %v213 = vpack.c.b16 %v203, %v202
    %v214 = vpack.c.b16 %v205, %v204
    %v215 = vpack.c.b16 %v207, %v206
    %224 = vmatprep.subr.bf16.mxu0 0
    %225 = vmatpush1.bf16.msra.mxu0 %v215
    %226 = vmatprep.subr.bf16.mxu0 0
    %227 = vmatpush1.bf16.msra.mxu0 %v214
    %228 = vmatprep.subr.bf16.mxu0 0
    %229 = vmatpush1.bf16.msra.mxu0 %v213
    %230 = vmatprep.subr.bf16.mxu0 0
    %231 = vmatpush1.bf16.msra.mxu0 %v212
    %232 = vmatprep.subr.bf16.mxu0 0
    %233 = vmatpush1.bf16.msra.mxu0 %v211
    %234 = vmatprep.subr.bf16.mxu0 0
    %235 = vmatpush1.bf16.msra.mxu0 %v210
    %236 = vmatprep.subr.bf16.mxu0 0
    %237 = vmatpush1.bf16.msra.mxu0 %v209
    %238 = vmatprep.subr.bf16.mxu0 0
    %239 = vmatpush1.bf16.msra.mxu0 %v208
    %240 = vmatprep.subr.bf16.mxu0 0
    %241 = vmatpush2.bf16.msra.mxu0 0
    %242 = vmatprep.subr.bf16.mxu0 0
    %243 = vmatpush2.bf16.msra.mxu0 0
    %244 = vmatprep.subr.bf16.mxu0 0
    %245 = vmatpush2.bf16.msra.mxu0 0
    %246 = vmatprep.subr.bf16.mxu0 0
    %247 = vmatpush2.bf16.msra.mxu0 0
    %248 = vmatprep.subr.bf16.mxu0 0
    %249 = vmatpush2.bf16.msra.mxu0 0
    %250 = vmatprep.subr.bf16.mxu0 0
    %251 = vmatpush2.bf16.msra.mxu0 0
    %252 = vmatprep.subr.bf16.mxu0 0
    %253 = vmatpush2.bf16.msra.mxu0 0
    %254 = vmatprep.subr.bf16.mxu0 0
    %255 = vmatpush2.bf16.msra.mxu0 0
    %256 = vmatprep.mubr.bf16.mxu0 0
    %257 = vmatmul.mubr.bf16.gmra.mxu0 %v175
    %v258 = vpop.f32.mrf.mxu0
    %v259 = vadd.f32 %v153, %v258
    %v260 = vpop.f32.mrf.mxu0
    %v261 = vpop.f32.mrf.mxu0
    %v262 = vpop.f32.mrf.mxu0
    %263 = vdwg.mxu0
    %v264 = vmax.f32 %v259, 0.0
    %v265 = vmin.f32 %v264, 1.0
    %v266 = vpack.c.bf16 %v265, %v265
    %267 = vmatprep.subr.bf16.mxu0 0
    %268 = vmatpush1.bf16.msra.mxu0 %v215
    %269 = vmatprep.subr.bf16.mxu0 0
    %270 = vmatpush1.bf16.msra.mxu0 %v214
    %271 = vmatprep.subr.bf16.mxu0 0
    %272 = vmatpush1.bf16.msra.mxu0 %v213
    %273 = vmatprep.subr.bf16.mxu0 0
    %274 = vmatpush1.bf16.msra.mxu0 %v212
    %275 = vmatprep.subr.bf16.mxu0 0
    %276 = vmatpush1.bf16.msra.mxu0 %v211
    %277 = vmatprep.subr.bf16.mxu0 0
    %278 = vmatpush1.bf16.msra.mxu0 %v210
    %279 = vmatprep.subr.bf16.mxu0 0
    %280 = vmatpush1.bf16.msra.mxu0 %v209
    %281 = vmatprep.subr.bf16.mxu0 0
    %282 = vmatpush1.bf16.msra.mxu0 %v208
    %283 = vmatprep.subr.bf16.mxu0 0
    %284 = vmatpush2.bf16.msra.mxu0 0
    %285 = vmatprep.subr.bf16.mxu0 0
    %286 = vmatpush2.bf16.msra.mxu0 0
    %287 = vmatprep.subr.bf16.mxu0 0
    %288 = vmatpush2.bf16.msra.mxu0 0
    %289 = vmatprep.subr.bf16.mxu0 0
    %290 = vmatpush2.bf16.msra.mxu0 0
    %291 = vmatprep.subr.bf16.mxu0 0
    %292 = vmatpush2.bf16.msra.mxu0 0
    %293 = vmatprep.subr.bf16.mxu0 0
    %294 = vmatpush2.bf16.msra.mxu0 0
    %295 = vmatprep.subr.bf16.mxu0 0
    %296 = vmatpush2.bf16.msra.mxu0 0
    %297 = vmatprep.subr.bf16.mxu0 0
    %298 = vmatpush2.bf16.msra.mxu0 0
    %299 = vmatprep.mubr.bf16.mxu0 0
    %300 = vmatmul.mubr.bf16.gmra.mxu0 %v266
    %v301 = vpop.f32.mrf.mxu0
    %v302 = vadd.f32 %v153, %v301
    %v303 = vpop.f32.mrf.mxu0
    %v304 = vpop.f32.mrf.mxu0
    %v305 = vpop.f32.mrf.mxu0
    %306 = vdwg.mxu0
    %v307 = vmax.f32 %v302, 0.0
    %v308 = vmin.f32 %v307, 1.0
    %v309 = vpack.c.bf16 %v308, %v308
    %310 = vmatprep.subr.bf16.mxu0 0
    %311 = vmatpush1.bf16.msra.mxu0 %v215
    %312 = vmatprep.subr.bf16.mxu0 0
    %313 = vmatpush1.bf16.msra.mxu0 %v214
    %314 = vmatprep.subr.bf16.mxu0 0
    %315 = vmatpush1.bf16.msra.mxu0 %v213
    %316 = vmatprep.subr.bf16.mxu0 0
    %317 = vmatpush1.bf16.msra.mxu0 %v212
    %318 = vmatprep.subr.bf16.mxu0 0
    %319 = vmatpush1.bf16.msra.mxu0 %v211
    %320 = vmatprep.subr.bf16.mxu0 0
    %321 = vmatpush1.bf16.msra.mxu0 %v210
    %322 = vmatprep.subr.bf16.mxu0 0
    %323 = vmatpush1.bf16.msra.mxu0 %v209
    %324 = vmatprep.subr.bf16.mxu0 0
    %325 = vmatpush1.bf16.msra.mxu0 %v208
    %326 = vmatprep.subr.bf16.mxu0 0
    %327 = vmatpush2.bf16.msra.mxu0 0
    %328 = vmatprep.subr.bf16.mxu0 0
    %329 = vmatpush2.bf16.msra.mxu0 0
    %330 = vmatprep.subr.bf16.mxu0 0
    %331 = vmatpush2.bf16.msra.mxu0 0
    %332 = vmatprep.subr.bf16.mxu0 0
    %333 = vmatpush2.bf16.msra.mxu0 0
    %334 = vmatprep.subr.bf16.mxu0 0
    %335 = vmatpush2.bf16.msra.mxu0 0
    %336 = vmatprep.subr.bf16.mxu0 0
    %337 = vmatpush2.bf16.msra.mxu0 0
    %338 = vmatprep.subr.bf16.mxu0 0
    %339 = vmatpush2.bf16.msra.mxu0 0
    %340 = vmatprep.subr.bf16.mxu0 0
    %341 = vmatpush2.bf16.msra.mxu0 0
    %342 = vmatprep.mubr.bf16.mxu0 0
    %343 = vmatmul.mubr.bf16.gmra.mxu0 %v309
    %v344 = vpop.f32.mrf.mxu0
    %v345 = vadd.f32 %v153, %v344
    %v346 = vpop.f32.mrf.mxu0
    %v347 = vpop.f32.mrf.mxu0
    %v348 = vpop.f32.mrf.mxu0
    %349 = vdwg.mxu0
    %v350 = vmax.f32 %v345, 0.0
    %v351 = vmin.f32 %v350, 1.0
    %v352 = vpack.c.bf16 %v351, %v351
    %353 = vmatprep.subr.bf16.mxu0 0
    %354 = vmatpush1.bf16.msra.mxu0 %v215
    %355 = vmatprep.subr.bf16.mxu0 0
    %356 = vmatpush1.bf16.msra.mxu0 %v214
    %357 = vmatprep.subr.bf16.mxu0 0
    %358 = vmatpush1.bf16.msra.mxu0 %v213
    %359 = vmatprep.subr.bf16.mxu0 0
    %360 = vmatpush1.bf16.msra.mxu0 %v212
    %361 = vmatprep.subr.bf16.mxu0 0
    %362 = vmatpush1.bf16.msra.mxu0 %v211
    %363 = vmatprep.subr.bf16.mxu0 0
    %364 = vmatpush1.bf16.msra.mxu0 %v210
    %365 = vmatprep.subr.bf16.mxu0 0
    %366 = vmatpush1.bf16.msra.mxu0 %v209
    %367 = vmatprep.subr.bf16.mxu0 0
    %368 = vmatpush1.bf16.msra.mxu0 %v208
    %369 = vmatprep.subr.bf16.mxu0 0
    %370 = vmatpush2.bf16.msra.mxu0 0
    %371 = vmatprep.subr.bf16.mxu0 0
    %372 = vmatpush2.bf16.msra.mxu0 0
    %373 = vmatprep.subr.bf16.mxu0 0
    %374 = vmatpush2.bf16.msra.mxu0 0
    %375 = vmatprep.subr.bf16.mxu0 0
    %376 = vmatpush2.bf16.msra.mxu0 0
    %377 = vmatprep.subr.bf16.mxu0 0
    %378 = vmatpush2.bf16.msra.mxu0 0
    %379 = vmatprep.subr.bf16.mxu0 0
    %380 = vmatpush2.bf16.msra.mxu0 0
    %381 = vmatprep.subr.bf16.mxu0 0
    %382 = vmatpush2.bf16.msra.mxu0 0
    %383 = vmatprep.subr.bf16.mxu0 0
    %384 = vmatpush2.bf16.msra.mxu0 0
    %385 = vmatprep.mubr.bf16.mxu0 0
    %386 = vmatmul.mubr.bf16.gmra.mxu0 %v352
    %v387 = vpop.f32.mrf.mxu0
    %v388 = vadd.f32 %v153, %v387
    %v389 = vpop.f32.mrf.mxu0
    %v390 = vpop.f32.mrf.mxu0
    %v391 = vpop.f32.mrf.mxu0
    %392 = vdwg.mxu0
    %v393 = vmax.f32 %v388, 0.0
    %v394 = vmin.f32 %v393, 1.0
    %395 = vst [vmem:[%s5] sm:$0xff] %v394
    // Predicated region
    $region30: #{forward.1} parent=1 // pred_check
      _
    $region31: #{forward.1} parent=1 // pred_check_branch
      %397 = sbr.rel (0) target = $region33
    $region32: #{forward.1} parent=1 // pred_region
      _
    $region33: #{forward.1} parent=1 // pred_fallthru
      _
    // Predicated region
    $region34: #{forward.1} parent=1 // pred_check
      _
    $region35: #{forward.1} parent=1 // pred_check_branch
      %399 = sbr.rel (0) target = $region37
    $region36: #{forward.1} parent=1 // pred_region
      _
    $region37: #{forward.1} parent=1 // pred_fallthru
      _
    %400 = vsyncpa [#allocation3], 1
    %401 = vsyncpa [#allocation5], 1

</llo_original>
